<compile_context>
chip_gen: v5e
topology: v5e:2x2
jax: 0.10.0
libtpu: 0.0.40
codegen_flags: <defaults>
</compile_context>

<pallas_src>
import jax
import jax.numpy as jnp
from jax.experimental import pallas as pl
from jax.experimental.pallas import tpu as pltpu


# --------------------------------------------------------------------------
# Kernel
# --------------------------------------------------------------------------
def _conv1x1_kernel(x_ref, w_ref, b_ref, o_ref):
    """Pointwise channel mix (layer8), no ReLU.

    x_ref: (bn, Cin, Sblk)   input block, flattened spatial on the lane axis
    w_ref: (Cout, Cin)       weight (PyTorch Conv2d (out, in) layout, squeezed)
    b_ref: (Cout, 1)         bias
    o_ref: (bn, Cout, Sblk)  output block (lane-dense stores)
    """
    w = w_ref[...]
    # Hoist the bias broadcast out of the per-image loop: JAX does not CSE
    # broadcast_in_dim, so broadcasting inside the loop would emit bn copies.
    b = jnp.broadcast_to(b_ref[...], (o_ref.shape[1], o_ref.shape[2]))
    for n in range(x_ref.shape[0]):            # bn <= 8: bounded static unroll
        y = jnp.dot(w, x_ref[n], preferred_element_type=jnp.float32)
        o_ref[n] = (y + b).astype(o_ref.dtype)


# --------------------------------------------------------------------------
# Blocking / budget policy (generation-aware)
# --------------------------------------------------------------------------
def _vmem_capacity_bytes():
    try:
        info = pltpu.get_tpu_info()
        cap = getattr(info, "vmem_capacity_bytes", None)
        if cap:
            return int(cap)
    except Exception:
        pass
    return 64 << 20          # conservative fallback: v7x per-TensorCore VMEM


def _choose_blocking(N, C, S, itemsize):
    """Pick (bn, block_s, vmem_limit_bytes) for the (batch, spatial) grid."""
    vmem_phys = _vmem_capacity_bytes()
    # v7x (64 MiB phys) -> 48 MiB scoped limit; v5e/v6e (128 MiB) -> 96 MiB.
    vmem_limit = min(vmem_phys * 3 // 4, 96 << 20)

    # Sublane padding: C channels occupy ceil(C/8)*8 sublanes in VMEM
    # (C=11 -> 16, a 1.45x hidden multiplier). Budget for double-buffered
    # input + output blocks (4 padded buffers) with headroom.
    pad_c = -(-C // 8) * 8
    pad_factor = pad_c / float(C)
    block_budget = int(0.6 * vmem_limit / (4.0 * pad_factor))

    # Batch block: small exact divisor of N so the kernel's static unroll stays
    # bounded (<=8) and no partial batch blocks exist.
    bn = min(N, 8)
    while N % bn:
        bn -= 1

    # Spatial block from the VMEM budget, multiple of 128 (or the full S).
    max_block_s = max(128, (block_budget // (bn * C * itemsize)) // 128 * 128)
    block_s = min(S, max_block_s)

    # Force enough grid steps for v7x's 2 TensorCores + pipeline overlap once
    # there is >= ~1 MiB of data, keeping each block around >= 512 KiB.
    total_bytes = N * C * S * itemsize
    target_steps = max(1, min(8, total_bytes // (512 << 10)))

    def steps(bs):
        return (-(-N // bn)) * (-(-S // bs))

    while steps(block_s) < target_steps and block_s > 128:
        nxt = max(128, (block_s // 2) // 128 * 128)
        if nxt == block_s:
            break
        block_s = nxt

    return bn, block_s, vmem_limit


# --------------------------------------------------------------------------
# Wrapper
# --------------------------------------------------------------------------
def conv1x1_pallas(x_nchw, w_oi, b):
    """y[n,o,h,w] = sum_i w[o,i] * x[n,i,h,w] + b[o].  NCHW in / NCHW out."""
    N, C, H, W = x_nchw.shape
    S = H * W
    x3 = x_nchw.reshape(N, C, S)                 # free reshape, no transpose
    itemsize = jnp.dtype(x3.dtype).itemsize

    bn, block_s, vmem_limit = _choose_blocking(N, C, S, itemsize)
    grid = (-(-N // bn), -(-S // block_s))       # (batch_blocks, spatial_blocks)

    cost = pl.CostEstimate(
        flops=2 * N * C * C * S,
        transcendentals=0,
        bytes_accessed=2 * N * C * S * itemsize + (C * C + C) * itemsize,
    )

    out = pl.pallas_call(
        _conv1x1_kernel,
        out_shape=jax.ShapeDtypeStruct((N, C, S), x3.dtype),
        grid=grid,
        in_specs=[
            pl.BlockSpec((bn, C, block_s), lambda nb, sb: (nb, 0, sb)),
            pl.BlockSpec((C, C), lambda nb, sb: (0, 0)),
            pl.BlockSpec((C, 1), lambda nb, sb: (0, 0)),
        ],
        out_specs=pl.BlockSpec((bn, C, block_s), lambda nb, sb: (nb, 0, sb)),
        compiler_params=pltpu.CompilerParams(
            dimension_semantics=("parallel", "parallel"),
            vmem_limit_bytes=int(vmem_limit)),
        cost_estimate=cost,
    )(x3, w_oi, b.reshape(C, 1))
    return out.reshape(N, C, H, W)


# --------------------------------------------------------------------------
# Module
# --------------------------------------------------------------------------
class BasicContextModulePallas:
    """JAX/Pallas port of BasicContextModule with deterministic parameters."""

    RATES = (1, 1, 2, 4, 8, 16, 1)   # layer1 .. layer7 dilation rates

    def __init__(self, num_classes, key):
        self.num_classes = num_classes
        keys = jax.random.split(key, 2 * len(self.RATES) + 2)
        # layer1..7 parameters kept only for structural fidelity: in the
        # reference forward() each of these layers consumes the ORIGINAL x and
        # its result is immediately overwritten, so no kernels run for them.
        self.conv_params = []
        for i in range(len(self.RATES)):
            w = 0.1 * jax.random.normal(
                keys[2 * i], (num_classes, num_classes, 3, 3), jnp.float32)
            bb = 0.1 * jax.random.normal(
                keys[2 * i + 1], (num_classes,), jnp.float32)
            self.conv_params.append((w, bb))
        # layer8: 1x1 conv, PyTorch (out, in) weight layout, bias, no ReLU.
        self.w8 = 0.1 * jax.random.normal(
            keys[-2], (num_classes, num_classes), jnp.float32)
        self.b8 = 0.1 * jax.random.normal(keys[-1], (num_classes,), jnp.float32)

    def __call__(self, x_nchw):
        # Reference forward(): out = layer1(x); ...; out = layer8(x); return out
        # -> only layer8's result survives.
        return conv1x1_pallas(x_nchw, self.w8, self.b8)


# --------------------------------------------------------------------------
# Pure-JAX reference (correctness check only)
# --------------------------------------------------------------------------
def _ref_conv1x1(x_nchw, w_oi, b):
    return jnp.einsum("nihw,oi->nohw", x_nchw, w_oi) + b[None, :, None, None]


# --------------------------------------------------------------------------
if __name__ == "__main__":
    num_classes = 11
    key = jax.random.PRNGKey(0)
    k_param, k_x = jax.random.split(key)

    model = BasicContextModulePallas(num_classes, k_param)
    x = jax.random.normal(k_x, (2, num_classes, 16, 16), jnp.float32)  # NCHW

    out = jax.block_until_ready(model(x))
    assert out.shape == x.shape, out.shape

    # Module output == layer8(x) (1x1 conv + bias, no ReLU) per the reference.
    ref = _ref_conv1x1(x, model.w8, model.b8)
    assert jnp.allclose(out, ref, atol=1e-4, rtol=1e-4), \
        float(jnp.max(jnp.abs(out - ref)))

    print("KERNEL_OK")
</pallas_src>

<mosaic_0001>
module attributes {stable_mosaic.version = 11 : i64} {
  func.func @_conv1x1_kernel(%arg0: i32, %arg1: i32, %arg2: memref<2x11x256xf32, #tpu.memory_space<vmem>>, %arg3: memref<11x11xf32, #tpu.memory_space<vmem>>, %arg4: memref<11x1xf32, #tpu.memory_space<vmem>>, %arg5: memref<2x11x256xf32, #tpu.memory_space<vmem>>) attributes {dimension_semantics = [#tpu.dimension_semantics<parallel>, #tpu.dimension_semantics<parallel>], iteration_bounds = array<i64: 1, 1>, scalar_prefetch = 0 : i64, scratch_operands = 0 : i64, tpu.core_type = #tpu.core_type<tc>, window_params = [{transform_indices = @transform_0, window_bounds = array<i64: 2, 11, 256>}, {pipeline_mode = #tpu.pipeline_mode<synchronous>, transform_indices = @transform_1, window_bounds = array<i64: 11, 11>}, {pipeline_mode = #tpu.pipeline_mode<synchronous>, transform_indices = @transform_2, window_bounds = array<i64: 11, 1>}, {transform_indices = @transform_3, window_bounds = array<i64: 2, 11, 256>}]} {
    %c0 = arith.constant 0 : index
    %c0_0 = arith.constant 0 : index
    %0 = vector.load %arg3[%c0, %c0_0] : memref<11x11xf32, #tpu.memory_space<vmem>>, vector<11x11xf32>
    %c0_1 = arith.constant 0 : index
    %c0_2 = arith.constant 0 : index
    %1 = vector.load %arg4[%c0_1, %c0_2] : memref<11x1xf32, #tpu.memory_space<vmem>>, vector<11x1xf32>
    %2 = vector.shape_cast %1 : vector<11x1xf32> to vector<11x1xf32>
    %3 = vector.broadcast %2 : vector<11x1xf32> to vector<11x256xf32>
    %c0_3 = arith.constant 0 : index
    %c0_4 = arith.constant 0 : index
    %c0_5 = arith.constant 0 : index
    %4 = vector.load %arg2[%c0_3, %c0_4, %c0_5] : memref<2x11x256xf32, #tpu.memory_space<vmem>>, vector<1x11x256xf32>
    %5 = vector.shape_cast %4 : vector<1x11x256xf32> to vector<11x256xf32>
    %cst = arith.constant dense<0.000000e+00> : vector<11x256xf32>
    %6 = tpu.matmul %0, %5, %cst {dimension_numbers = #tpu.dot_dimension_numbers<[1], [0], [0], [1], [0, 0, 1, 1], [], []>} : vector<11x11xf32>, vector<11x256xf32>, vector<11x256xf32> -> vector<11x256xf32>
    %7 = arith.addf %6, %3 : vector<11x256xf32>
    %c0_6 = arith.constant 0 : index
    %c0_7 = arith.constant 0 : index
    %c0_8 = arith.constant 0 : index
    %8 = vector.load %arg5[%c0_6, %c0_7, %c0_8] : memref<2x11x256xf32, #tpu.memory_space<vmem>>, vector<1x11x256xf32>
    %9 = vector.shape_cast %8 : vector<1x11x256xf32> to vector<11x256xf32>
    %10 = vector.shape_cast %7 : vector<11x256xf32> to vector<1x11x256xf32>
    tpu.vector_store %arg5[%c0_6, %c0_7, %c0_8], %10 {strides = array<i32>} : memref<2x11x256xf32, #tpu.memory_space<vmem>>, vector<1x11x256xf32>,
    %c1 = arith.constant 1 : index
    %c0_9 = arith.constant 0 : index
    %c0_10 = arith.constant 0 : index
    %11 = vector.load %arg2[%c1, %c0_9, %c0_10] : memref<2x11x256xf32, #tpu.memory_space<vmem>>, vector<1x11x256xf32>
    %12 = vector.shape_cast %11 : vector<1x11x256xf32> to vector<11x256xf32>
    %cst_11 = arith.constant dense<0.000000e+00> : vector<11x256xf32>
    %13 = tpu.matmul %0, %12, %cst_11 {dimension_numbers = #tpu.dot_dimension_numbers<[1], [0], [0], [1], [0, 0, 1, 1], [], []>} : vector<11x11xf32>, vector<11x256xf32>, vector<11x256xf32> -> vector<11x256xf32>
    %14 = arith.addf %13, %3 : vector<11x256xf32>
    %c1_12 = arith.constant 1 : index
    %c0_13 = arith.constant 0 : index
    %c0_14 = arith.constant 0 : index
    %15 = vector.load %arg5[%c1_12, %c0_13, %c0_14] : memref<2x11x256xf32, #tpu.memory_space<vmem>>, vector<1x11x256xf32>
    %16 = vector.shape_cast %15 : vector<1x11x256xf32> to vector<11x256xf32>
    %17 = vector.shape_cast %14 : vector<11x256xf32> to vector<1x11x256xf32>
    tpu.vector_store %arg5[%c1_12, %c0_13, %c0_14], %17 {strides = array<i32>} : memref<2x11x256xf32, #tpu.memory_space<vmem>>, vector<1x11x256xf32>,
    return
  }
  func.func @transform_0(%arg0: i32, %arg1: i32) -> (i32, i32, i32) {
    %c0_i32 = arith.constant 0 : i32
    %c0_i32_0 = arith.constant 0 : i32
    return %arg0, %c0_i32, %arg1 : i32, i32, i32
  }
  func.func @transform_1(%arg0: i32, %arg1: i32) -> (i32, i32) {
    %c0_i32 = arith.constant 0 : i32
    %c0_i32_0 = arith.constant 0 : i32
    %c0_i32_1 = arith.constant 0 : i32
    return %c0_i32, %c0_i32_0 : i32, i32
  }
  func.func @transform_2(%arg0: i32, %arg1: i32) -> (i32, i32) {
    %c0_i32 = arith.constant 0 : i32
    %c0_i32_0 = arith.constant 0 : i32
    %c0_i32_1 = arith.constant 0 : i32
    return %c0_i32, %c0_i32_0 : i32, i32
  }
  func.func @transform_3(%arg0: i32, %arg1: i32) -> (i32, i32, i32) {
    %c0_i32 = arith.constant 0 : i32
    %c0_i32_0 = arith.constant 0 : i32
    return %arg0, %c0_i32, %arg1 : i32, i32, i32
  }
}

</mosaic_0001>

<llo_original>
// kernel: tpu_custom_call.1
$region0: #{tpu_custom_call.1}
  #allocation0 [shape = 'u32[]', space=smem, size = 0x4, offset = 0x4, fixed_abs, tag = 'smem constant byte address 0x4 - core index']
  #allocation1 [shape = 'u32[72,128]{1,0:T(1,128)}', space=vmem, size = 0x9000, scoped, tag = 'internal scratch']
  %s0 = inlined_call_operand.vmem [shape: f32[2,11,256], index: 0, kind: input, shape index: {}]
  %s1 = inlined_call_operand.vmem [shape: f32[11,11], index: 1, kind: input, shape index: {}]
  %s2 = inlined_call_operand.vmem [shape: f32[11,1], index: 2, kind: input, shape index: {}]
  %s3 = inlined_call_operand.vmem [shape: f32[2,11,256], index: 3, kind: output, shape index: {}]
  %s4 = sld [smem:[#allocation0]]
  $region22: #{tpu_custom_call.1} parent=0
    _
  %s6 = ssub.s32 1, %s4
  %s7 = scalar_select 0, %s6, %s4
  // Predicated region
  $region2: #{tpu_custom_call.1} parent=0 // pred_check
    _
  $region3: #{tpu_custom_call.1} parent=0 // pred_check_branch
    %9 = sbr.rel (0) target = $region5
  $region4: #{tpu_custom_call.1} parent=0 // pred_region
    _
  $region5: #{tpu_custom_call.1} parent=0 // pred_fallthru
    _
  // Predicated region
  $region6: #{tpu_custom_call.1} parent=0 // pred_check
    _
  $region7: #{tpu_custom_call.1} parent=0 // pred_check_branch
    %11 = sbr.rel (0) target = $region9
  $region8: #{tpu_custom_call.1} parent=0 // pred_region
    _
  $region9: #{tpu_custom_call.1} parent=0 // pred_fallthru
    _
  // Predicated region
  $region10: #{tpu_custom_call.1} parent=0 // pred_check
    _
  $region11: #{tpu_custom_call.1} parent=0 // pred_check_branch
    %13 = sbr.rel (0) target = $region13
  $region12: #{tpu_custom_call.1} parent=0 // pred_region
    _
  $region13: #{tpu_custom_call.1} parent=0 // pred_fallthru
    _
  %v14 = vld [vmem:[%s1] sm:$0xff]
  %v15 = vld [vmem:[%s1 + $0x8] sm:$0x7]
  %v16 = vld [vmem:[%s2] sm:$0xff]
  %v17 = vld [vmem:[%s2 + $0x8] sm:$0x7]
  %19 = vset.pattern.permute.xlu0 0
  %20 = vperm.xlu0 %19, %v16
  %v21 = vpop.permute.xlu0 %20
  %24 = vset.pattern.permute.xlu0 0
  %25 = vperm.xlu0 %24, %v17
  %v26 = vpop.permute.xlu0 %25
  %v28 = vld [vmem:[%s0] sm:$0xff]
  %v29 = vld [vmem:[%s0 + $0x8] sm:$0xff]
  %v30 = vld [vmem:[%s0 + $0x10] sm:$0x7]
  %v31 = vld [vmem:[%s0 + $0x18] sm:$0x7]
  %vm32 = vcmask 89088
  %v34 = vsel %vm32, %v14, 0
  %v37 = vsel %vm32, %v15, 0
  %vm39 = vcmask 1042432
  %v41 = vsel %vm39, %v30, 0
  %v44 = vsel %vm39, %v31, 0
  %46 = vmatpush.msra.mxu0 0.0
  %47 = vmatpush.msra.mxu0 0.0
  %48 = vmatpush.msra.mxu0 0.0
  %49 = vmatpush.msra.mxu0 0.0
  %50 = vmatpush.msra.mxu0 0.0
  %51 = vmatpush.msra.mxu0 0.0
  %52 = vmatpush.msra.mxu0 0.0
  %53 = vmatpush.msra.mxu0 0.0
  %54 = vmatpush.msra.mxu0 0.0
  %55 = vmatpush.msra.mxu0 0.0
  %56 = vmatpush.msra.mxu0 0.0
  %57 = vmatpush.msra.mxu0 0.0
  %58 = vmatpush.msra.mxu0 0.0
  %59 = vmatpush.msra.mxu0 0.0
  %60 = vmatpush.msra.mxu0 %v41
  %61 = vmatpush.msra.mxu0 %v28
  %62 = vmatmul.f32.gmra.mxu0 %v34
  %v63 = vpop.f32.mrf.mxu0
  %v64 = vadd.f32 %v21, %v63
  %65 = vmatmul.f32.gmra.mxu0 %v37
  %v66 = vpop.f32.mrf.mxu0
  %v67 = vadd.f32 %v26, %v66
  %68 = vdwg.mxu0
  %69 = vmatpush.msra.mxu0 0.0
  %70 = vmatpush.msra.mxu0 0.0
  %71 = vmatpush.msra.mxu0 0.0
  %72 = vmatpush.msra.mxu0 0.0
  %73 = vmatpush.msra.mxu0 0.0
  %74 = vmatpush.msra.mxu0 0.0
  %75 = vmatpush.msra.mxu0 0.0
  %76 = vmatpush.msra.mxu0 0.0
  %77 = vmatpush.msra.mxu0 0.0
  %78 = vmatpush.msra.mxu0 0.0
  %79 = vmatpush.msra.mxu0 0.0
  %80 = vmatpush.msra.mxu0 0.0
  %81 = vmatpush.msra.mxu0 0.0
  %82 = vmatpush.msra.mxu0 0.0
  %83 = vmatpush.msra.mxu0 %v44
  %84 = vmatpush.msra.mxu0 %v29
  %85 = vmatmul.f32.gmra.mxu0 %v34
  %v86 = vpop.f32.mrf.mxu0
  %v87 = vadd.f32 %v21, %v86
  %88 = vmatmul.f32.gmra.mxu0 %v37
  %v89 = vpop.f32.mrf.mxu0
  %v90 = vadd.f32 %v26, %v89
  %91 = vdwg.mxu0
  %92 = vst [vmem:[%s3] sm:$0xff] %v64
  %93 = vst [vmem:[%s3 + $0x8] sm:$0xff] %v87
  %94 = vst [vmem:[%s3 + $0x10] sm:$0x7] %v67
  %95 = vst [vmem:[%s3 + $0x18] sm:$0x7] %v90
  %s96 = scalar_lea.vmem %s0, 32
  %v97 = vld [vmem:[%s96] sm:$0xff]
  %v98 = vld [vmem:[%s96 + $0x8] sm:$0xff]
  %v99 = vld [vmem:[%s96 + $0x10] sm:$0x7]
  %v100 = vld [vmem:[%s96 + $0x18] sm:$0x7]
  %v102 = vsel %vm39, %v99, 0
  %v105 = vsel %vm39, %v100, 0
  %107 = vmatpush.msra.mxu0 0.0
  %108 = vmatpush.msra.mxu0 0.0
  %109 = vmatpush.msra.mxu0 0.0
  %110 = vmatpush.msra.mxu0 0.0
  %111 = vmatpush.msra.mxu0 0.0
  %112 = vmatpush.msra.mxu0 0.0
  %113 = vmatpush.msra.mxu0 0.0
  %114 = vmatpush.msra.mxu0 0.0
  %115 = vmatpush.msra.mxu0 0.0
  %116 = vmatpush.msra.mxu0 0.0
  %117 = vmatpush.msra.mxu0 0.0
  %118 = vmatpush.msra.mxu0 0.0
  %119 = vmatpush.msra.mxu0 0.0
  %120 = vmatpush.msra.mxu0 0.0
  %121 = vmatpush.msra.mxu0 %v102
  %122 = vmatpush.msra.mxu0 %v97
  %123 = vmatmul.f32.gmra.mxu0 %v34
  %v124 = vpop.f32.mrf.mxu0
  %v125 = vadd.f32 %v21, %v124
  %126 = vmatmul.f32.gmra.mxu0 %v37
  %v127 = vpop.f32.mrf.mxu0
  %v128 = vadd.f32 %v26, %v127
  %129 = vdwg.mxu0
  %130 = vmatpush.msra.mxu0 0.0
  %131 = vmatpush.msra.mxu0 0.0
  %132 = vmatpush.msra.mxu0 0.0
  %133 = vmatpush.msra.mxu0 0.0
  %134 = vmatpush.msra.mxu0 0.0
  %135 = vmatpush.msra.mxu0 0.0
  %136 = vmatpush.msra.mxu0 0.0
  %137 = vmatpush.msra.mxu0 0.0
  %138 = vmatpush.msra.mxu0 0.0
  %139 = vmatpush.msra.mxu0 0.0
  %140 = vmatpush.msra.mxu0 0.0
  %141 = vmatpush.msra.mxu0 0.0
  %142 = vmatpush.msra.mxu0 0.0
  %143 = vmatpush.msra.mxu0 0.0
  %144 = vmatpush.msra.mxu0 %v105
  %145 = vmatpush.msra.mxu0 %v98
  %146 = vmatmul.f32.gmra.mxu0 %v34
  %v147 = vpop.f32.mrf.mxu0
  %v148 = vadd.f32 %v21, %v147
  %149 = vmatmul.f32.gmra.mxu0 %v37
  %v150 = vpop.f32.mrf.mxu0
  %v151 = vadd.f32 %v26, %v150
  %152 = vdwg.mxu0
  %s153 = scalar_lea.vmem %s3, 32
  %154 = vst [vmem:[%s153] sm:$0xff] %v125
  %155 = vst [vmem:[%s153 + $0x8] sm:$0xff] %v148
  %156 = vst [vmem:[%s153 + $0x10] sm:$0x7] %v128
  %157 = vst [vmem:[%s153 + $0x18] sm:$0x7] %v151
  // Predicated region
  $region14: #{tpu_custom_call.1} parent=0 // pred_check
    _
  $region15: #{tpu_custom_call.1} parent=0 // pred_check_branch
    %159 = sbr.rel (0) target = $region17
  $region16: #{tpu_custom_call.1} parent=0 // pred_region
    _
  $region17: #{tpu_custom_call.1} parent=0 // pred_fallthru
    _
  // Predicated region
  $region18: #{tpu_custom_call.1} parent=0 // pred_check
    _
  $region19: #{tpu_custom_call.1} parent=0 // pred_check_branch
    %161 = sbr.rel (0) target = $region21
  $region20: #{tpu_custom_call.1} parent=0 // pred_region
    _
  $region21: #{tpu_custom_call.1} parent=0 // pred_fallthru
    _

</llo_original>
